<compile_context>
chip_gen: v5e
topology: v5e:2x2
jax: 0.10.0
libtpu: 0.0.40
codegen_flags: <defaults>
</compile_context>

<pallas_src>
from functools import partial

import jax
import jax.numpy as jnp
from jax import lax
from jax.experimental import pallas as pl
from jax.experimental.pallas import tpu as pltpu  # noqa: F401  (TPU backend assumed)

LANE = 128   # TPU lane width: every feature dim is zero-padded to this
SUB = 8      # sublane width: batch is padded to a multiple of this


# ---------------------------------------------------------------------------
# Pallas kernels (one fused kernel per network variant)
# ---------------------------------------------------------------------------
def _fused_mlp_kernel(x_ref, w_ref, b_ref, o_ref, *, n_layers):
    """Simple-DQN path:  h = relu(h @ W_i + b_i) for all but the last layer."""
    h = x_ref[...]                                     # [Bp, 128]
    for i in range(n_layers):                          # static unrolled loop
        h = jnp.dot(h, w_ref[i], preferred_element_type=jnp.float32) + b_ref[i]
        if i < n_layers - 1:
            h = jnp.maximum(h, 0.0)
    o_ref[...] = h.astype(o_ref.dtype)


def _fused_dueling_kernel(x_ref, wt_ref, bt_ref, wc1_ref, bc1_ref,
                          wc2_ref, bc2_ref, o_ref, *,
                          n_trunk, action_size, batch_real):
    """Dueling path, fully fused.

    trunk:   h  = relu(... relu(x @ Wt_i + bt_i) ...)
    level 1: h1 = relu(h @ Wc1 + bc1)        lanes [0:H3]=val hid, [H3:2H3]=adv hid
    level 2: o2 = h1 @ Wc2 + bc2             lanes [0:A]=adv, lane A=val
    combine: q  = adv + val - mean(adv)      (global mean, masked to real entries)
    """
    h = x_ref[...]                                     # [Bp, 128]
    for i in range(n_trunk):                           # static unrolled loop
        h = jnp.maximum(
            jnp.dot(h, wt_ref[i], preferred_element_type=jnp.float32) + bt_ref[i],
            0.0)
    # fused value+advantage hidden layer (one MXU push for both branches)
    h1 = jnp.maximum(
        jnp.dot(h, wc1_ref[...], preferred_element_type=jnp.float32) + bc1_ref[...],
        0.0)
    # fused second level (block-diagonal weights): adv in lanes [0:A], val in lane A
    out2 = jnp.dot(h1, wc2_ref[...], preferred_element_type=jnp.float32) + bc2_ref[...]

    rows = lax.broadcasted_iota(jnp.int32, out2.shape, 0)
    cols = lax.broadcasted_iota(jnp.int32, out2.shape, 1)
    adv_mask = (rows < batch_real) & (cols < action_size)
    adv_mean = jnp.sum(jnp.where(adv_mask, out2, 0.0)) / jnp.float32(
        batch_real * action_size)

    val = out2[:, action_size:action_size + 1]          # [Bp, 1]
    q = out2 + val - adv_mean                           # lanes [0:A] hold q
    o_ref[...] = q.astype(o_ref.dtype)


# ---------------------------------------------------------------------------
# BlockSpec helper (single full block, no grid)
# ---------------------------------------------------------------------------
def _full(shape):
    return pl.BlockSpec(shape, lambda: (0,) * len(shape))


# ---------------------------------------------------------------------------
# Parameter construction (deterministic, PyTorch-style uniform init)
# ---------------------------------------------------------------------------
def init_linear(key, fan_in, fan_out):
    kw, kb = jax.random.split(key)
    bound = 1.0 / jnp.sqrt(jnp.float32(fan_in))
    w = jax.random.uniform(kw, (fan_in, fan_out), jnp.float32, -bound, bound)
    b = jax.random.uniform(kb, (1, fan_out), jnp.float32, -bound, bound)
    return w, b


def make_qnetwork_params(key, state_size, action_size,
                         hidden_layers=(64, 32), use_dueling=False):
    params = {}
    keys = jax.random.split(key, 8)
    if use_dueling:
        dims = [state_size] + list(hidden_layers[:-1])           # shared trunk
        params["fcs"] = [init_linear(keys[i], dims[i], dims[i + 1])
                         for i in range(len(dims) - 1)]
        params["fc_val1"] = init_linear(keys[4], hidden_layers[-2], hidden_layers[-1])
        params["fc_val2"] = init_linear(keys[5], hidden_layers[-1], 1)
        params["fc_adv1"] = init_linear(keys[6], hidden_layers[-2], hidden_layers[-1])
        params["fc_adv2"] = init_linear(keys[7], hidden_layers[-1], action_size)
    else:
        dims = [state_size] + list(hidden_layers) + [action_size]
        params["fcs"] = [init_linear(keys[i], dims[i], dims[i + 1])
                         for i in range(len(dims) - 1)]
    return params


# ---------------------------------------------------------------------------
# Packing: pad to (128, 128) lane-dense tiles and stack/concatenate weights
# ---------------------------------------------------------------------------
def _pad2(a, rows, cols):
    out = jnp.zeros((rows, cols), jnp.float32)
    return out.at[:a.shape[0], :a.shape[1]].set(a)


def pack_simple_params(params):
    ws = [w for w, _ in params["fcs"]]
    bs = [b for _, b in params["fcs"]]
    w_stack = jnp.stack([_pad2(w, LANE, LANE) for w in ws])       # [L,128,128]
    b_stack = jnp.stack([_pad2(b, 1, LANE) for b in bs])          # [L,1,128]
    return w_stack, b_stack


def pack_dueling_params(params, action_size):
    trunk_w = [w for w, _ in params["fcs"]]
    trunk_b = [b for _, b in params["fcs"]]
    wt = jnp.stack([_pad2(w, LANE, LANE) for w in trunk_w])       # [T,128,128]
    bt = jnp.stack([_pad2(b, 1, LANE) for b in trunk_b])          # [T,1,128]

    wv1, bv1 = params["fc_val1"]
    wv2, bv2 = params["fc_val2"]
    wa1, ba1 = params["fc_adv1"]
    wa2, ba2 = params["fc_adv2"]
    H2, H3 = wv1.shape
    A = action_size
    assert 2 * H3 <= LANE and A + 1 <= LANE and H2 <= LANE

    # level 1: concat value/advantage first layers side by side
    wc1 = jnp.zeros((LANE, LANE), jnp.float32)
    wc1 = wc1.at[:H2, 0:H3].set(wv1).at[:H2, H3:2 * H3].set(wa1)
    bc1 = jnp.zeros((1, LANE), jnp.float32)
    bc1 = bc1.at[:, 0:H3].set(bv1).at[:, H3:2 * H3].set(ba1)

    # level 2: block-diagonal -> output lanes [0:A]=adv, lane A=val
    wc2 = jnp.zeros((LANE, LANE), jnp.float32)
    wc2 = wc2.at[H3:2 * H3, 0:A].set(wa2).at[0:H3, A:A + 1].set(wv2)
    bc2 = jnp.zeros((1, LANE), jnp.float32)
    bc2 = bc2.at[:, 0:A].set(ba2).at[:, A:A + 1].set(bv2)

    return wt, bt, wc1, bc1, wc2, bc2


# ---------------------------------------------------------------------------
# Forward passes (one pallas_call each)
# ---------------------------------------------------------------------------
def _pad_input(x):
    B, Din = x.shape
    Bp = max(SUB, pl.cdiv(B, SUB) * SUB)
    xp = jnp.zeros((Bp, LANE), jnp.float32).at[:B, :Din].set(x)
    return xp, B, Bp


def qnetwork_forward_simple(packed, x, action_size):
    w_stack, b_stack = packed
    xp, B, Bp = _pad_input(x)
    L = int(w_stack.shape[0])
    cost = pl.CostEstimate(
        flops=2 * Bp * LANE * LANE * L,
        transcendentals=0,
        bytes_accessed=int(4 * (xp.size + w_stack.size + b_stack.size + Bp * LANE)),
    )
    q_pad = pl.pallas_call(
        partial(_fused_mlp_kernel, n_layers=L),
        out_shape=jax.ShapeDtypeStruct((Bp, LANE), jnp.float32),
        in_specs=[_full((Bp, LANE)),
                  _full((L, LANE, LANE)),
                  _full((L, 1, LANE))],
        out_specs=_full((Bp, LANE)),
        cost_estimate=cost,
    )(xp, w_stack, b_stack)
    return q_pad[:B, :action_size]


def qnetwork_forward_dueling(packed, x, action_size):
    wt, bt, wc1, bc1, wc2, bc2 = packed
    xp, B, Bp = _pad_input(x)
    T = int(wt.shape[0])
    cost = pl.CostEstimate(
        flops=2 * Bp * LANE * LANE * (T + 2),
        transcendentals=0,
        bytes_accessed=int(4 * (xp.size + wt.size + bt.size + wc1.size + bc1.size
                                + wc2.size + bc2.size + Bp * LANE)),
    )
    q_pad = pl.pallas_call(
        partial(_fused_dueling_kernel, n_trunk=T,
                action_size=action_size, batch_real=B),
        out_shape=jax.ShapeDtypeStruct((Bp, LANE), jnp.float32),
        in_specs=[_full((Bp, LANE)),
                  _full((T, LANE, LANE)),
                  _full((T, 1, LANE)),
                  _full((LANE, LANE)),
                  _full((1, LANE)),
                  _full((LANE, LANE)),
                  _full((1, LANE))],
        out_specs=_full((Bp, LANE)),
        cost_estimate=cost,
    )(xp, wt, bt, wc1, bc1, wc2, bc2)
    return q_pad[:B, :action_size]


# ---------------------------------------------------------------------------
# Pure-JAX reference mirroring the PyTorch forward
# ---------------------------------------------------------------------------
def qnetwork_forward_ref(params, x, use_dueling=False):
    if use_dueling:
        for (w, b) in params["fcs"]:
            x = jax.nn.relu(x @ w + b)
        wv1, bv1 = params["fc_val1"]
        wv2, bv2 = params["fc_val2"]
        wa1, ba1 = params["fc_adv1"]
        wa2, ba2 = params["fc_adv2"]
        val = jax.nn.relu(x @ wv1 + bv1) @ wv2 + bv2
        adv = jax.nn.relu(x @ wa1 + ba1) @ wa2 + ba2
        return adv + val - jnp.mean(adv)          # GLOBAL mean, as in the spec
    else:
        for (w, b) in params["fcs"][:-1]:
            x = jax.nn.relu(x @ w + b)
        w, b = params["fcs"][-1]
        return x @ w + b


# ---------------------------------------------------------------------------
if __name__ == "__main__":
    state_size = 8
    action_size = 4
    hidden_layers = (64, 32)
    batch = 2

    key = jax.random.PRNGKey(0)
    k_x, k_simple, k_duel = jax.random.split(key, 3)
    x = jax.random.normal(k_x, (batch, state_size), jnp.float32)

    # ----- simple DQN path -----
    params_s = make_qnetwork_params(k_simple, state_size, action_size,
                                    hidden_layers, use_dueling=False)
    packed_s = pack_simple_params(params_s)
    q_s = jax.block_until_ready(qnetwork_forward_simple(packed_s, x, action_size))
    q_s_ref = qnetwork_forward_ref(params_s, x, use_dueling=False)

    # ----- dueling DQN path -----
    params_d = make_qnetwork_params(k_duel, state_size, action_size,
                                    hidden_layers, use_dueling=True)
    packed_d = pack_dueling_params(params_d, action_size)
    q_d = jax.block_until_ready(qnetwork_forward_dueling(packed_d, x, action_size))
    q_d_ref = qnetwork_forward_ref(params_d, x, use_dueling=True)

    assert q_s.shape == (batch, action_size)
    assert q_d.shape == (batch, action_size)
    assert jnp.allclose(q_s, q_s_ref, atol=1e-4, rtol=1e-4), (q_s, q_s_ref)
    assert jnp.allclose(q_d, q_d_ref, atol=1e-4, rtol=1e-4), (q_d, q_d_ref)

    print("KERNEL_OK")
</pallas_src>

<mosaic_0001>
module attributes {stable_mosaic.version = 11 : i64} {
  func.func @_fused_mlp_kernel(%arg0: memref<8x128xf32, #tpu.memory_space<vmem>>, %arg1: memref<3x128x128xf32, #tpu.memory_space<vmem>>, %arg2: memref<3x1x128xf32, #tpu.memory_space<vmem>>, %arg3: memref<8x128xf32, #tpu.memory_space<vmem>>) attributes {dimension_semantics = [], scalar_prefetch = 0 : i64, scratch_operands = 0 : i64, tpu.core_type = #tpu.core_type<tc>} {
    %c0 = arith.constant 0 : index
    %c0_0 = arith.constant 0 : index
    %0 = vector.load %arg0[%c0, %c0_0] : memref<8x128xf32, #tpu.memory_space<vmem>>, vector<8x128xf32>
    %c0_1 = arith.constant 0 : index
    %c0_2 = arith.constant 0 : index
    %c0_3 = arith.constant 0 : index
    %1 = vector.load %arg1[%c0_1, %c0_2, %c0_3] : memref<3x128x128xf32, #tpu.memory_space<vmem>>, vector<1x128x128xf32>
    %2 = vector.shape_cast %1 : vector<1x128x128xf32> to vector<128x128xf32>
    %cst = arith.constant dense<0.000000e+00> : vector<8x128xf32>
    %3 = tpu.matmul %0, %2, %cst {dimension_numbers = #tpu.dot_dimension_numbers<[1], [0], [0], [1], [0, 0, 1, 1], [], []>} : vector<8x128xf32>, vector<128x128xf32>, vector<8x128xf32> -> vector<8x128xf32>
    %c0_4 = arith.constant 0 : index
    %c0_5 = arith.constant 0 : index
    %c0_6 = arith.constant 0 : index
    %4 = vector.load %arg2[%c0_4, %c0_5, %c0_6] : memref<3x1x128xf32, #tpu.memory_space<vmem>>, vector<1x1x128xf32>
    %5 = vector.shape_cast %4 : vector<1x1x128xf32> to vector<1x128xf32>
    %6 = vector.broadcast %5 : vector<1x128xf32> to vector<8x128xf32>
    %7 = arith.addf %3, %6 : vector<8x128xf32>
    %cst_7 = arith.constant 0.000000e+00 : f32
    %8 = vector.broadcast %cst_7 : f32 to vector<8x128xf32>
    %9 = arith.maximumf %7, %8 : vector<8x128xf32>
    %c1 = arith.constant 1 : index
    %c0_8 = arith.constant 0 : index
    %c0_9 = arith.constant 0 : index
    %10 = vector.load %arg1[%c1, %c0_8, %c0_9] : memref<3x128x128xf32, #tpu.memory_space<vmem>>, vector<1x128x128xf32>
    %11 = vector.shape_cast %10 : vector<1x128x128xf32> to vector<128x128xf32>
    %cst_10 = arith.constant dense<0.000000e+00> : vector<8x128xf32>
    %12 = tpu.matmul %9, %11, %cst_10 {dimension_numbers = #tpu.dot_dimension_numbers<[1], [0], [0], [1], [0, 0, 1, 1], [], []>} : vector<8x128xf32>, vector<128x128xf32>, vector<8x128xf32> -> vector<8x128xf32>
    %c1_11 = arith.constant 1 : index
    %c0_12 = arith.constant 0 : index
    %c0_13 = arith.constant 0 : index
    %13 = vector.load %arg2[%c1_11, %c0_12, %c0_13] : memref<3x1x128xf32, #tpu.memory_space<vmem>>, vector<1x1x128xf32>
    %14 = vector.shape_cast %13 : vector<1x1x128xf32> to vector<1x128xf32>
    %15 = vector.broadcast %14 : vector<1x128xf32> to vector<8x128xf32>
    %16 = arith.addf %12, %15 : vector<8x128xf32>
    %cst_14 = arith.constant 0.000000e+00 : f32
    %17 = vector.broadcast %cst_14 : f32 to vector<8x128xf32>
    %18 = arith.maximumf %16, %17 : vector<8x128xf32>
    %c2 = arith.constant 2 : index
    %c0_15 = arith.constant 0 : index
    %c0_16 = arith.constant 0 : index
    %19 = vector.load %arg1[%c2, %c0_15, %c0_16] : memref<3x128x128xf32, #tpu.memory_space<vmem>>, vector<1x128x128xf32>
    %20 = vector.shape_cast %19 : vector<1x128x128xf32> to vector<128x128xf32>
    %cst_17 = arith.constant dense<0.000000e+00> : vector<8x128xf32>
    %21 = tpu.matmul %18, %20, %cst_17 {dimension_numbers = #tpu.dot_dimension_numbers<[1], [0], [0], [1], [0, 0, 1, 1], [], []>} : vector<8x128xf32>, vector<128x128xf32>, vector<8x128xf32> -> vector<8x128xf32>
    %c2_18 = arith.constant 2 : index
    %c0_19 = arith.constant 0 : index
    %c0_20 = arith.constant 0 : index
    %22 = vector.load %arg2[%c2_18, %c0_19, %c0_20] : memref<3x1x128xf32, #tpu.memory_space<vmem>>, vector<1x1x128xf32>
    %23 = vector.shape_cast %22 : vector<1x1x128xf32> to vector<1x128xf32>
    %24 = vector.broadcast %23 : vector<1x128xf32> to vector<8x128xf32>
    %25 = arith.addf %21, %24 : vector<8x128xf32>
    %c0_21 = arith.constant 0 : index
    %c0_22 = arith.constant 0 : index
    %26 = vector.load %arg3[%c0_21, %c0_22] : memref<8x128xf32, #tpu.memory_space<vmem>>, vector<8x128xf32>
    tpu.vector_store %arg3[%c0_21, %c0_22], %25 {strides = array<i32>} : memref<8x128xf32, #tpu.memory_space<vmem>>, vector<8x128xf32>,
    return
  }
}

</mosaic_0001>

<llo_original>
// kernel: tpu_custom_call.1
$region0: #{tpu_custom_call.1}
  #allocation0 [shape = 'u32[]', space=smem, size = 0x4, offset = 0x4, fixed_abs, tag = 'smem constant byte address 0x4 - core index']
  #allocation1 [shape = 'u32[72,128]{1,0:T(1,128)}', space=vmem, size = 0x9000, scoped, tag = 'internal scratch']
  %s0 = inlined_call_operand.hbm [shape: f32[8,128], index: 0, kind: input, shape index: {}]
  %s1 = inlined_call_operand.hbm [shape: f32[3,128,128], index: 1, kind: input, shape index: {}]
  %s2 = inlined_call_operand.hbm [shape: f32[3,1,128], index: 2, kind: input, shape index: {}]
  %s3 = inlined_call_operand.hbm [shape: f32[8,128], index: 3, kind: output, shape index: {}]
  %s4 = sld [smem:[#allocation0]]
  $region34: #{tpu_custom_call.1} parent=0
    _
  %s6 = ssub.s32 1, %s4
  %s7 = scalar_select 0, %s6, %s4
  $region1: #{tpu_custom_call.1} parent=0
    #allocation2 [shape = 'u8[4096]{0}', space=vmem, size = 0x1000, scoped, tag = 'input window, operand 0, single buffered']
    #allocation3 [shape = 's32[1]{0}', space=sflag, size = 0x4, scoped, tag = 'scoped memory for tpu_custom_call.1']
    #allocation4 [shape = 's32[1]{0}', space=sflag, size = 0x4, scoped, tag = 'scoped memory for tpu_custom_call.1']
    #allocation5 [shape = 'u8[196608]{0}', space=vmem, size = 0x30000, scoped, tag = 'input window, operand 1, single buffered']
    #allocation6 [shape = 's32[1]{0}', space=sflag, size = 0x4, scoped, tag = 'scoped memory for tpu_custom_call.1']
    #allocation7 [shape = 'u8[1536]{0}', space=vmem, size = 0x800, scoped, tag = 'input window, operand 2, single buffered']
    #allocation8 [shape = 'u8[4096]{0}', space=vmem, size = 0x1000, scoped, tag = 'output window, operand 0, single buffered']
    %8 = vsyncpa [#allocation3], 0
    %9 = vsyncpa [#allocation6], 0
    %10 = vsyncpa [#allocation4], 0
    // Predicated region
    $region2: #{tpu_custom_call.1} parent=1 // pred_check
      _
    $region3: #{tpu_custom_call.1} parent=1 // pred_check_branch
      %12 = sbr.rel (0) target = $region5
    $region4: #{tpu_custom_call.1} parent=1 // pred_region
      %14 = vsyncadd [#allocation3], 0
      %s16 = sshll.u32 %s0, 4
      %s17 = int_to_ptr.hbm [resolvable:$true] %s16
      %s18 = sshll.u32 [#allocation2], 4
      %s19 = int_to_ptr.vmem [resolvable:$true] %s18
      %21 = dma.hbm_to_vmem [thread:$0]  %s17, 128, %s19, [#allocation3]
    $region5: #{tpu_custom_call.1} parent=1 // pred_fallthru
      _
    // Predicated region
    $region6: #{tpu_custom_call.1} parent=1 // pred_check
      _
    $region7: #{tpu_custom_call.1} parent=1 // pred_check_branch
      %23 = sbr.rel (0) target = $region9
    $region8: #{tpu_custom_call.1} parent=1 // pred_region
      %25 = vsyncadd [#allocation6], 0
      %s26 = sshll.u32 %s1, 4
      %s27 = int_to_ptr.hbm [resolvable:$true] %s26
      %s28 = sshll.u32 [#allocation5], 4
      %s29 = int_to_ptr.vmem [resolvable:$true] %s28
      %34 = dma.hbm_to_vmem [thread:$0]  %s27, 6144, %s29, [#allocation6], 128, 128, 8
    $region9: #{tpu_custom_call.1} parent=1 // pred_fallthru
      _
    // Predicated region
    $region10: #{tpu_custom_call.1} parent=1 // pred_check
      _
    $region11: #{tpu_custom_call.1} parent=1 // pred_check_branch
      %36 = sbr.rel (0) target = $region13
    $region12: #{tpu_custom_call.1} parent=1 // pred_region
      %38 = vsyncadd [#allocation6], 0
      %s39 = sshll.u32 %s2, 4
      %s40 = int_to_ptr.hbm [resolvable:$true] %s39
      %s41 = sshll.u32 [#allocation7], 4
      %s42 = int_to_ptr.vmem [resolvable:$true] %s41
      %47 = dma.hbm_to_vmem [thread:$0]  %s40, 48, %s42, [#allocation6], 16, 16, 1
    $region13: #{tpu_custom_call.1} parent=1 // pred_fallthru
      _
    // Predicated region
    $region14: #{tpu_custom_call.1} parent=1 // pred_check
      _
    $region15: #{tpu_custom_call.1} parent=1 // pred_check_branch
      %49 = sbr.rel (0) target = $region17
    $region16: #{tpu_custom_call.1} parent=1 // pred_region
      %51 = dma.done [#allocation3], 128
    $region17: #{tpu_custom_call.1} parent=1 // pred_fallthru
      _
    // Predicated region
    $region18: #{tpu_custom_call.1} parent=1 // pred_check
      _
    $region19: #{tpu_custom_call.1} parent=1 // pred_check_branch
      %53 = sbr.rel (0) target = $region21
    $region20: #{tpu_custom_call.1} parent=1 // pred_region
      %55 = dma.done [#allocation6], 6144
    $region21: #{tpu_custom_call.1} parent=1 // pred_fallthru
      _
    // Predicated region
    $region22: #{tpu_custom_call.1} parent=1 // pred_check
      _
    $region23: #{tpu_custom_call.1} parent=1 // pred_check_branch
      %57 = sbr.rel (0) target = $region25
    $region24: #{tpu_custom_call.1} parent=1 // pred_region
      %59 = dma.done [#allocation6], 48
    $region25: #{tpu_custom_call.1} parent=1 // pred_fallthru
      _
    %v60 = vld [vmem:[#allocation2] sm:$0xff]
    %v61 = vld [vmem:[#allocation5] sm:$0xff]
    %v62 = vld [vmem:[#allocation5 + $0x8] sm:$0xff]
    %v63 = vld [vmem:[#allocation5 + $0x10] sm:$0xff]
    %v64 = vld [vmem:[#allocation5 + $0x18] sm:$0xff]
    %v65 = vld [vmem:[#allocation5 + $0x20] sm:$0xff]
    %v66 = vld [vmem:[#allocation5 + $0x28] sm:$0xff]
    %v67 = vld [vmem:[#allocation5 + $0x30] sm:$0xff]
    %v68 = vld [vmem:[#allocation5 + $0x38] sm:$0xff]
    %v69 = vld [vmem:[#allocation5 + $0x40] sm:$0xff]
    %v70 = vld [vmem:[#allocation5 + $0x48] sm:$0xff]
    %v71 = vld [vmem:[#allocation5 + $0x50] sm:$0xff]
    %v72 = vld [vmem:[#allocation5 + $0x58] sm:$0xff]
    %v73 = vld [vmem:[#allocation5 + $0x60] sm:$0xff]
    %v74 = vld [vmem:[#allocation5 + $0x68] sm:$0xff]
    %v75 = vld [vmem:[#allocation5 + $0x70] sm:$0xff]
    %v76 = vld [vmem:[#allocation5 + $0x78] sm:$0xff]
    %v77 = vld [vmem:[#allocation7] sm:$0x1]
    %v79 = vperm.slane %v77, 0
    %81 = vmatpush.msra.mxu0 %v76
    %82 = vmatpush.msra.mxu0 %v75
    %83 = vmatpush.msra.mxu0 %v74
    %84 = vmatpush.msra.mxu0 %v73
    %85 = vmatpush.msra.mxu0 %v72
    %86 = vmatpush.msra.mxu0 %v71
    %87 = vmatpush.msra.mxu0 %v70
    %88 = vmatpush.msra.mxu0 %v69
    %89 = vmatpush.msra.mxu0 %v68
    %90 = vmatpush.msra.mxu0 %v67
    %91 = vmatpush.msra.mxu0 %v66
    %92 = vmatpush.msra.mxu0 %v65
    %93 = vmatpush.msra.mxu0 %v64
    %94 = vmatpush.msra.mxu0 %v63
    %95 = vmatpush.msra.mxu0 %v62
    %96 = vmatpush.msra.mxu0 %v61
    %97 = vmatmul.f32.gmra.mxu0 %v60
    %v98 = vpop.f32.mrf.mxu0
    %v99 = vadd.f32 %v79, %v98
    %100 = vdwg.mxu0
    %v101 = vmax.f32 %v99, 0.0
    %s102 = scalar_lea.vmem [#allocation5], 128
    %v103 = vld [vmem:[%s102] sm:$0xff]
    %v104 = vld [vmem:[%s102 + $0x8] sm:$0xff]
    %v105 = vld [vmem:[%s102 + $0x10] sm:$0xff]
    %v106 = vld [vmem:[%s102 + $0x18] sm:$0xff]
    %v107 = vld [vmem:[%s102 + $0x20] sm:$0xff]
    %v108 = vld [vmem:[%s102 + $0x28] sm:$0xff]
    %v109 = vld [vmem:[%s102 + $0x30] sm:$0xff]
    %v110 = vld [vmem:[%s102 + $0x38] sm:$0xff]
    %v111 = vld [vmem:[%s102 + $0x40] sm:$0xff]
    %v112 = vld [vmem:[%s102 + $0x48] sm:$0xff]
    %v113 = vld [vmem:[%s102 + $0x50] sm:$0xff]
    %v114 = vld [vmem:[%s102 + $0x58] sm:$0xff]
    %v115 = vld [vmem:[%s102 + $0x60] sm:$0xff]
    %v116 = vld [vmem:[%s102 + $0x68] sm:$0xff]
    %v117 = vld [vmem:[%s102 + $0x70] sm:$0xff]
    %v118 = vld [vmem:[%s102 + $0x78] sm:$0xff]
    %s119 = scalar_lea.vmem [#allocation7], 1
    %v120 = vld [vmem:[%s119] sm:$0x1]
    %v122 = vperm.slane %v120, 0
    %124 = vmatpush.msra.mxu0 %v118
    %125 = vmatpush.msra.mxu0 %v117
    %126 = vmatpush.msra.mxu0 %v116
    %127 = vmatpush.msra.mxu0 %v115
    %128 = vmatpush.msra.mxu0 %v114
    %129 = vmatpush.msra.mxu0 %v113
    %130 = vmatpush.msra.mxu0 %v112
    %131 = vmatpush.msra.mxu0 %v111
    %132 = vmatpush.msra.mxu0 %v110
    %133 = vmatpush.msra.mxu0 %v109
    %134 = vmatpush.msra.mxu0 %v108
    %135 = vmatpush.msra.mxu0 %v107
    %136 = vmatpush.msra.mxu0 %v106
    %137 = vmatpush.msra.mxu0 %v105
    %138 = vmatpush.msra.mxu0 %v104
    %139 = vmatpush.msra.mxu0 %v103
    %140 = vmatmul.f32.gmra.mxu0 %v101
    %v141 = vpop.f32.mrf.mxu0
    %v142 = vadd.f32 %v122, %v141
    %143 = vdwg.mxu0
    %v144 = vmax.f32 %v142, 0.0
    %s145 = scalar_lea.vmem [#allocation5], 256
    %v146 = vld [vmem:[%s145] sm:$0xff]
    %v147 = vld [vmem:[%s145 + $0x8] sm:$0xff]
    %v148 = vld [vmem:[%s145 + $0x10] sm:$0xff]
    %v149 = vld [vmem:[%s145 + $0x18] sm:$0xff]
    %v150 = vld [vmem:[%s145 + $0x20] sm:$0xff]
    %v151 = vld [vmem:[%s145 + $0x28] sm:$0xff]
    %v152 = vld [vmem:[%s145 + $0x30] sm:$0xff]
    %v153 = vld [vmem:[%s145 + $0x38] sm:$0xff]
    %v154 = vld [vmem:[%s145 + $0x40] sm:$0xff]
    %v155 = vld [vmem:[%s145 + $0x48] sm:$0xff]
    %v156 = vld [vmem:[%s145 + $0x50] sm:$0xff]
    %v157 = vld [vmem:[%s145 + $0x58] sm:$0xff]
    %v158 = vld [vmem:[%s145 + $0x60] sm:$0xff]
    %v159 = vld [vmem:[%s145 + $0x68] sm:$0xff]
    %v160 = vld [vmem:[%s145 + $0x70] sm:$0xff]
    %v161 = vld [vmem:[%s145 + $0x78] sm:$0xff]
    %s162 = scalar_lea.vmem [#allocation7], 2
    %v163 = vld [vmem:[%s162] sm:$0x1]
    %v165 = vperm.slane %v163, 0
    %167 = vmatpush.msra.mxu0 %v161
    %168 = vmatpush.msra.mxu0 %v160
    %169 = vmatpush.msra.mxu0 %v159
    %170 = vmatpush.msra.mxu0 %v158
    %171 = vmatpush.msra.mxu0 %v157
    %172 = vmatpush.msra.mxu0 %v156
    %173 = vmatpush.msra.mxu0 %v155
    %174 = vmatpush.msra.mxu0 %v154
    %175 = vmatpush.msra.mxu0 %v153
    %176 = vmatpush.msra.mxu0 %v152
    %177 = vmatpush.msra.mxu0 %v151
    %178 = vmatpush.msra.mxu0 %v150
    %179 = vmatpush.msra.mxu0 %v149
    %180 = vmatpush.msra.mxu0 %v148
    %181 = vmatpush.msra.mxu0 %v147
    %182 = vmatpush.msra.mxu0 %v146
    %183 = vmatmul.f32.gmra.mxu0 %v144
    %v184 = vpop.f32.mrf.mxu0
    %v185 = vadd.f32 %v165, %v184
    %186 = vdwg.mxu0
    %187 = vst [vmem:[#allocation8] sm:$0xff] %v185
    // Predicated region
    $region26: #{tpu_custom_call.1} parent=1 // pred_check
      _
    $region27: #{tpu_custom_call.1} parent=1 // pred_check_branch
      %189 = sbr.rel (0) target = $region29
    $region28: #{tpu_custom_call.1} parent=1 // pred_region
      %191 = vsyncadd [#allocation4], 0
      %s193 = sshll.u32 [#allocation8], 4
      %s194 = int_to_ptr.vmem [resolvable:$true] %s193
      %s195 = sshll.u32 %s3, 4
      %s196 = int_to_ptr.hbm [resolvable:$true] %s195
      %198 = dma.vmem_to_hbm [thread:$0]  %s194, 128, %s196, [#allocation4]
    $region29: #{tpu_custom_call.1} parent=1 // pred_fallthru
      _
    // Predicated region
    $region30: #{tpu_custom_call.1} parent=1 // pred_check
      _
    $region31: #{tpu_custom_call.1} parent=1 // pred_check_branch
      %200 = sbr.rel (0) target = $region33
    $region32: #{tpu_custom_call.1} parent=1 // pred_region
      %202 = dma.done [#allocation4], 128
    $region33: #{tpu_custom_call.1} parent=1 // pred_fallthru
      _
    %203 = vsyncpa [#allocation3], 1
    %204 = vsyncpa [#allocation6], 1
    %205 = vsyncpa [#allocation4], 1

</llo_original>
